<compile_context>
chip_gen: v7x
topology: tpu7x:2x2x1
jax: 0.10.0
libtpu: 0.0.40
codegen_flags: <defaults>
</compile_context>

<pallas_src>
import math
import functools
import numpy as np
import jax
import jax.numpy as jnp
from jax.experimental import pallas as pl
from jax.experimental.pallas import tpu as pltpu


def _round_up(x, m):
    return ((x + m - 1) // m) * m


# ----------------------------------------------------------------------------
# Tiled matmul (+bias, optional fused GELU)
# ----------------------------------------------------------------------------
def _matmul_kernel(a_ref, b_ref, bias_ref, o_ref, acc_ref, *, act):
    @pl.when(pl.program_id(2) == 0)
    def _():
        acc_ref[...] = jnp.zeros_like(acc_ref)

    acc_ref[...] += jnp.dot(a_ref[...], b_ref[...],
                            preferred_element_type=jnp.float32)

    @pl.when(pl.program_id(2) == pl.num_programs(2) - 1)
    def _():
        y = acc_ref[...] + bias_ref[...]
        if act == "gelu":
            # TODO(synk): PyTorch nn.GELU default is exact erf; tanh approx used
            # here (EUP-friendly), small systematic numeric difference.
            y = jax.nn.gelu(y, approximate=True)
        o_ref[...] = y


def pallas_linear(x, w, b, act="none"):
    """y = x @ w + b (optionally fused GELU).  x: (..., K), w: (K, N), b: (N,)."""
    orig_shape = x.shape
    K = orig_shape[-1]
    M = int(np.prod(orig_shape[:-1]))
    N = w.shape[1]

    tm = min(256, _round_up(M, 8))
    tn = min(256, _round_up(N, 128))
    tk = min(512, _round_up(K, 128))
    Mp, Np, Kp = _round_up(M, tm), _round_up(N, tn), _round_up(K, tk)

    a = x.reshape(M, K).astype(jnp.bfloat16)
    if (Mp, Kp) != (M, K):
        a = jnp.pad(a, ((0, Mp - M), (0, Kp - K)))
    wb = w.astype(jnp.bfloat16)
    if (Kp, Np) != (K, N):
        wb = jnp.pad(wb, ((0, Kp - K), (0, Np - N)))
    bb = b.astype(jnp.float32).reshape(1, N)
    if Np != N:
        bb = jnp.pad(bb, ((0, 0), (0, Np - N)))

    out = pl.pallas_call(
        functools.partial(_matmul_kernel, act=act),
        out_shape=jax.ShapeDtypeStruct((Mp, Np), jnp.float32),
        grid=(Mp // tm, Np // tn, Kp // tk),
        in_specs=[
            pl.BlockSpec((tm, tk), lambda i, j, kk: (i, kk)),
            pl.BlockSpec((tk, tn), lambda i, j, kk: (kk, j)),
            pl.BlockSpec((1, tn), lambda i, j, kk: (0, j)),
        ],
        out_specs=pl.BlockSpec((tm, tn), lambda i, j, kk: (i, j)),
        scratch_shapes=[pltpu.VMEM((tm, tn), jnp.float32)],
        compiler_params=pltpu.CompilerParams(
            dimension_semantics=("parallel", "parallel", "arbitrary"),
            vmem_limit_bytes=64 * 1024 * 1024),
    )(a, wb, bb)
    out = out[:M, :N]
    return out.reshape(orig_shape[:-1] + (N,))


# ----------------------------------------------------------------------------
# LayerNorm (+ optional FiLM) — per-batch FiLM rows, no broadcast materialization
# ----------------------------------------------------------------------------
def _ln_kernel(x_ref, g_ref, b_ref, o_ref):
    x = x_ref[0]                                     # (HW, C)
    mu = jnp.mean(x, axis=-1, keepdims=True)
    var = jnp.mean(jnp.square(x - mu), axis=-1, keepdims=True)
    xn = (x - mu) * jax.lax.rsqrt(var + 1e-5)
    o_ref[0] = xn * g_ref[...] + b_ref[...]


def _ln_film_kernel(x_ref, g_ref, b_ref, sc_ref, sh_ref, o_ref):
    x = x_ref[0]                                     # (HW, C)
    mu = jnp.mean(x, axis=-1, keepdims=True)
    var = jnp.mean(jnp.square(x - mu), axis=-1, keepdims=True)
    xn = (x - mu) * jax.lax.rsqrt(var + 1e-5)
    y = xn * g_ref[...] + b_ref[...]
    o_ref[0] = y * (1.0 + sc_ref[0]) + sh_ref[0]     # (1,C) broadcast in-kernel


def pallas_layernorm(x3, gamma, beta):
    """x3: (B, HW, C) -> LN over C."""
    B, HW, C = x3.shape
    return pl.pallas_call(
        _ln_kernel,
        out_shape=jax.ShapeDtypeStruct((B, HW, C), jnp.float32),
        grid=(B,),
        in_specs=[
            pl.BlockSpec((1, HW, C), lambda b: (b, 0, 0)),
            pl.BlockSpec((1, C), lambda b: (0, 0)),
            pl.BlockSpec((1, C), lambda b: (0, 0)),
        ],
        out_specs=pl.BlockSpec((1, HW, C), lambda b: (b, 0, 0)),
        compiler_params=pltpu.CompilerParams(dimension_semantics=("parallel",)),
    )(x3.astype(jnp.float32),
      gamma.reshape(1, C).astype(jnp.float32),
      beta.reshape(1, C).astype(jnp.float32))


def pallas_layernorm_film(x3, gamma, beta, scale, shift):
    """x3: (B, HW, C); scale/shift: (B, 1, C) per-batch FiLM rows."""
    B, HW, C = x3.shape
    return pl.pallas_call(
        _ln_film_kernel,
        out_shape=jax.ShapeDtypeStruct((B, HW, C), jnp.float32),
        grid=(B,),
        in_specs=[
            pl.BlockSpec((1, HW, C), lambda b: (b, 0, 0)),
            pl.BlockSpec((1, C), lambda b: (0, 0)),
            pl.BlockSpec((1, C), lambda b: (0, 0)),
            pl.BlockSpec((1, 1, C), lambda b: (b, 0, 0)),
            pl.BlockSpec((1, 1, C), lambda b: (b, 0, 0)),
        ],
        out_specs=pl.BlockSpec((1, HW, C), lambda b: (b, 0, 0)),
        compiler_params=pltpu.CompilerParams(dimension_semantics=("parallel",)),
    )(x3.astype(jnp.float32),
      gamma.reshape(1, C).astype(jnp.float32),
      beta.reshape(1, C).astype(jnp.float32),
      scale.astype(jnp.float32), shift.astype(jnp.float32))


# ----------------------------------------------------------------------------
# Depthwise 7x7 conv
# ----------------------------------------------------------------------------
def _make_dw7_kernel(H, W, C):
    # TODO(synk): could be strip-mined over H with XLU roll-based dx shifts for
    # large H,W,C; full-image-per-batch block is fine at these sizes.
    def kernel(xp_ref, w_ref, b_ref, o_ref):
        xp = xp_ref[0]               # (H+6, W+6, C) f32
        w = w_ref[...]               # (49, C) bf16
        acc = jnp.zeros((H, W, C), jnp.float32)
        k = 0
        for dy in range(7):
            for dx in range(7):
                acc = acc + xp[dy:dy + H, dx:dx + W, :] * w[k]
                k += 1
        o_ref[0] = acc + b_ref[...]
    return kernel


def pallas_dwconv7(x, w, b):
    """Depthwise 7x7 conv, padding=3.  x: (B,H,W,C), w: (49,C), b: (C,)."""
    B, H, W, C = x.shape
    xp = jnp.pad(x.astype(jnp.float32), ((0, 0), (3, 3), (3, 3), (0, 0)))
    return pl.pallas_call(
        _make_dw7_kernel(H, W, C),
        out_shape=jax.ShapeDtypeStruct((B, H, W, C), jnp.float32),
        grid=(B,),
        in_specs=[
            pl.BlockSpec((1, H + 6, W + 6, C), lambda bb: (bb, 0, 0, 0)),
            pl.BlockSpec((49, C), lambda bb: (0, 0)),
            pl.BlockSpec((1, C), lambda bb: (0, 0)),
        ],
        out_specs=pl.BlockSpec((1, H, W, C), lambda bb: (bb, 0, 0, 0)),
        compiler_params=pltpu.CompilerParams(dimension_semantics=("parallel",)),
    )(xp, w, b.reshape(1, C).astype(jnp.float32))


# ----------------------------------------------------------------------------
# Head-batched attention (self / cross) with additive mask bias
# ----------------------------------------------------------------------------
def _make_attn_kernel(sm_scale):
    # TODO(synk): for large HW this should be flash-tiled over q/kv; at these
    # sizes the full per-image (nh,M,N) score block fits comfortably in VMEM.
    def kernel(q_ref, k_ref, v_ref, bias_ref, o_ref):
        q = q_ref[0]                                  # (nh, M, dh) bf16
        k = k_ref[0]                                  # (nh, N, dh) bf16
        v = v_ref[0]                                  # (nh, N, dh) bf16
        s = jnp.einsum('hmd,hnd->hmn', q, k,
                       preferred_element_type=jnp.float32) * sm_scale
        s = s + bias_ref[...]                         # (1,1,N) broadcast
        m = jnp.max(s, axis=-1, keepdims=True)
        m = jnp.maximum(m, -1e30)                     # NaN-safe for fully-masked rows
        p = jnp.exp(s - m)
        denom = jnp.sum(p, axis=-1, keepdims=True) + 1e-30
        o = jnp.einsum('hmn,hnd->hmd', p.astype(jnp.bfloat16), v,
                       preferred_element_type=jnp.float32)
        o_ref[0] = o * pl.reciprocal(denom, approx=True)
    return kernel


def pallas_attention(q, k, v, bias):
    """q: (B,nh,M,dh) bf16, k/v: (B,nh,N,dh) bf16, bias: (B,1,N) additive f32."""
    B, nh, M, dh = q.shape
    N = k.shape[2]
    sm_scale = 1.0 / math.sqrt(dh)
    return pl.pallas_call(
        _make_attn_kernel(sm_scale),
        out_shape=jax.ShapeDtypeStruct((B, nh, M, dh), jnp.float32),
        grid=(B,),
        in_specs=[
            pl.BlockSpec((1, nh, M, dh), lambda b: (b, 0, 0, 0)),
            pl.BlockSpec((1, nh, N, dh), lambda b: (b, 0, 0, 0)),
            pl.BlockSpec((1, nh, N, dh), lambda b: (b, 0, 0, 0)),
            pl.BlockSpec((1, 1, N), lambda b: (b, 0, 0)),
        ],
        out_specs=pl.BlockSpec((1, nh, M, dh), lambda b: (b, 0, 0, 0)),
        compiler_params=pltpu.CompilerParams(
            dimension_semantics=("parallel",),
            vmem_limit_bytes=64 * 1024 * 1024),
    )(q, k, v, bias.astype(jnp.float32))


# ----------------------------------------------------------------------------
# MSE: tiled lane-dense reduction with running VMEM accumulator
# ----------------------------------------------------------------------------
def _mse_kernel(a_ref, b_ref, o_ref, acc_ref):
    @pl.when(pl.program_id(0) == 0)
    def _():
        acc_ref[...] = jnp.zeros_like(acc_ref)
    d = a_ref[...] - b_ref[...]
    acc_ref[...] += jnp.sum(d * d, keepdims=True)
    @pl.when(pl.program_id(0) == pl.num_programs(0) - 1)
    def _():
        o_ref[...] = acc_ref[...]


def pallas_mse(a, b):
    T = int(np.prod(a.shape))
    lane = 128
    rows = _round_up(-(-T // lane), 8)
    tile_r = min(256, rows)
    Rp = _round_up(rows, tile_r)
    pad = Rp * lane - T
    af = jnp.pad(a.reshape(-1).astype(jnp.float32), (0, pad)).reshape(Rp, lane)
    bf = jnp.pad(b.reshape(-1).astype(jnp.float32), (0, pad)).reshape(Rp, lane)
    out = pl.pallas_call(
        _mse_kernel,
        out_shape=jax.ShapeDtypeStruct((1, 1), jnp.float32),
        grid=(Rp // tile_r,),
        in_specs=[pl.BlockSpec((tile_r, lane), lambda i: (i, 0)),
                  pl.BlockSpec((tile_r, lane), lambda i: (i, 0))],
        out_specs=pl.BlockSpec((1, 1), lambda i: (0, 0)),
        scratch_shapes=[pltpu.VMEM((1, 1), jnp.float32)],
        compiler_params=pltpu.CompilerParams(dimension_semantics=("arbitrary",)),
    )(af, bf)
    return out[0, 0] / T


# ----------------------------------------------------------------------------
# Conv glue (im2col / patchify in JAX, contraction via tiled Pallas matmul)
# ----------------------------------------------------------------------------
def _im2col(x, k, pad):
    # TODO(synk): im2col inflates HBM traffic by k*k; for production sizes the
    # tap loop should be moved inside a tiled conv kernel. Fine at demo sizes.
    B, H, W, C = x.shape
    xp = jnp.pad(x, ((0, 0), (pad, pad), (pad, pad), (0, 0)))
    cols = []
    for dy in range(k):
        for dx in range(k):
            cols.append(xp[:, dy:dy + H, dx:dx + W, :])
    return jnp.concatenate(cols, axis=-1)          # (B,H,W,k*k*C)


def conv2d(x, w, b, k, pad):
    """Stride-1 conv.  w: (k*k*Cin, Cout)."""
    return pallas_linear(_im2col(x, k, pad), w, b)


def conv2d_stride(x, w, b, k):
    """kernel = stride = k, no padding.  w: (k*k*Cin, Cout)."""
    B, H, W, C = x.shape
    x = x.reshape(B, H // k, k, W // k, k, C)
    x = x.transpose(0, 1, 3, 2, 4, 5).reshape(B, H // k, W // k, k * k * C)
    return pallas_linear(x, w, b)


def conv_transpose2(x, w, b):
    """ConvTranspose2d kernel=2 stride=2.  w: (Cin, 2*2*Cout), b: (Cout,)."""
    # TODO(synk): assumes (ky,kx,Cout) flattening of the transposed-conv weight.
    B, H, W, C = x.shape
    Cout = w.shape[1] // 4
    y = pallas_linear(x, w, jnp.tile(b, 4))
    y = y.reshape(B, H, W, 2, 2, Cout).transpose(0, 1, 3, 2, 4, 5)
    return y.reshape(B, 2 * H, 2 * W, Cout)


# ----------------------------------------------------------------------------
# Deterministic parameter init (matmul weights stored bf16 for the MXU)
# ----------------------------------------------------------------------------
class ParamInit:
    def __init__(self, seed=0):
        self.key = jax.random.PRNGKey(seed)

    def take(self):
        self.key, sub = jax.random.split(self.key)
        return sub

    def normal(self, shape, std=0.02):
        return (jax.random.normal(self.take(), shape, jnp.float32) * std
                ).astype(jnp.bfloat16)

    def zeros(self, shape):
        return jnp.zeros(shape, jnp.float32)


def sinusoidal_embedding(t, d):
    half = d // 2
    freqs = jnp.exp(-math.log(10000.0) * jnp.arange(half, dtype=jnp.float32) / half)
    args = t.astype(jnp.float32)[:, None] * freqs[None, :]
    return jnp.concatenate([jnp.sin(args), jnp.cos(args)], axis=-1)


# ----------------------------------------------------------------------------
# FiLM ConvNeXt (+ self/cross attention) block
# ----------------------------------------------------------------------------
def init_block(pi, d, d_t, d_cond=None):
    p = {
        "film_w": pi.normal((d_t, 2 * d)), "film_b": pi.zeros((2 * d,)),
        "dw_w": pi.normal((49, d)), "dw_b": pi.zeros((d,)),
        "ln_g": jnp.ones((d,), jnp.float32), "ln_b": pi.zeros((d,)),
        "pw1_w": pi.normal((d, 4 * d)), "pw1_b": pi.zeros((4 * d,)),
        "pw2_w": pi.normal((4 * d, d)), "pw2_b": pi.zeros((d,)),
        "aln_g": jnp.ones((d,), jnp.float32), "aln_b": pi.zeros((d,)),
        "wq": pi.normal((d, d)), "bq": pi.zeros((d,)),
        "wo": pi.normal((d, d)), "bo": pi.zeros((d,)),
    }
    dk = d if d_cond is None else d_cond
    p["wk"] = pi.normal((dk, d)); p["bk"] = pi.zeros((d,))
    p["wv"] = pi.normal((dk, d)); p["bv"] = pi.zeros((d,))
    return p


def film_convnext_block(p, x, t_emb, n_heads, cond=None, cond_bias=None):
    # TODO(synk): FiLMConvNeXtBlock / FiLMCrossAttentionConvNeXtBlock sources were
    # not provided; this implements a standard FiLM-modulated ConvNeXt block
    # followed by multi-head (self | cross) attention with residuals.
    B, H, W, C = x.shape
    HW = H * W

    film = pallas_linear(t_emb, p["film_w"], p["film_b"])        # (B, 2C)
    scale = film[:, :C].reshape(B, 1, C)
    shift = film[:, C:].reshape(B, 1, C)

    h = pallas_dwconv7(x, p["dw_w"], p["dw_b"])
    h = pallas_layernorm_film(h.reshape(B, HW, C), p["ln_g"], p["ln_b"], scale, shift)
    h = pallas_linear(h, p["pw1_w"], p["pw1_b"], act="gelu")
    h = pallas_linear(h, p["pw2_w"], p["pw2_b"])
    x = x + h.reshape(B, H, W, C)

    tnorm = pallas_layernorm(x.reshape(B, HW, C), p["aln_g"], p["aln_b"])
    q = pallas_linear(tnorm, p["wq"], p["bq"])
    kv_src = tnorm if cond is None else cond
    k = pallas_linear(kv_src, p["wk"], p["bk"])
    v = pallas_linear(kv_src, p["wv"], p["bv"])

    nh, dh = n_heads, C // n_heads
    L = kv_src.shape[1]

    def split_heads(a, n_tok):
        return a.reshape(B, n_tok, nh, dh).transpose(0, 2, 1, 3).astype(jnp.bfloat16)

    qh, kh, vh = split_heads(q, HW), split_heads(k, L), split_heads(v, L)
    if cond_bias is None:
        bias = jnp.zeros((B, 1, L), jnp.float32)
    else:
        bias = cond_bias.reshape(B, 1, L).astype(jnp.float32)

    oh = pallas_attention(qh, kh, vh, bias)                      # (B, nh, HW, dh)
    o = oh.transpose(0, 2, 1, 3).reshape(B, HW, C)
    o = pallas_linear(o, p["wo"], p["bo"])
    return x + o.reshape(B, H, W, C)


# ----------------------------------------------------------------------------
# ConditionalFiLMUNet
# ----------------------------------------------------------------------------
class ConditionalFiLMUNetJAX:
    def __init__(self, pi, in_channels, d_init, d_t, d_cond, n_heads,
                 n_scales=6, n_cross_attn_scales=4):
        assert n_scales >= n_cross_attn_scales > 0
        self.n_scales = n_scales
        self.self_attn_scales = n_scales - n_cross_attn_scales
        self.n_heads = n_heads
        self.d_t = d_t
        self.p = {
            "t1_w": pi.normal((d_t, 4 * d_t)), "t1_b": pi.zeros((4 * d_t,)),
            "t2_w": pi.normal((4 * d_t, d_t)), "t2_b": pi.zeros((d_t,)),
            "stem_w": pi.normal((49 * in_channels, d_init)), "stem_b": pi.zeros((d_init,)),
            "head_w": pi.normal((d_init, in_channels)), "head_b": pi.zeros((in_channels,)),
        }
        self.down_blocks, self.down_samples = [], []
        for scale in range(n_scales - 1):
            d = d_init * 2 ** scale
            if scale < self.self_attn_scales:
                self.down_blocks.append(init_block(pi, d, d_t))
            else:
                self.down_blocks.append(init_block(pi, d, d_t, d_cond))
            self.down_samples.append({"w": pi.normal((4 * d, 2 * d)), "b": pi.zeros((2 * d,))})
        self.mid_block = init_block(pi, d_init * 2 ** (n_scales - 1), d_t, d_cond)
        self.up_samples, self.up_combines, self.up_blocks = [], [], []
        for scale in range(n_scales - 2, -1, -1):
            d = d_init * 2 ** scale
            self.up_samples.append({"w": pi.normal((2 * d, 4 * d)), "b": pi.zeros((d,))})
            self.up_combines.append({"w": pi.normal((25 * 2 * d, d)), "b": pi.zeros((d,))})
            if scale < self.self_attn_scales:
                self.up_blocks.append(init_block(pi, d, d_t))
            else:
                self.up_blocks.append(init_block(pi, d, d_t, d_cond))

    def __call__(self, x, t, cond, attention_bias=None):
        # x: (B,H,W,Cin) NHWC
        t_emb = sinusoidal_embedding(t, self.d_t)
        t_emb = pallas_linear(t_emb, self.p["t1_w"], self.p["t1_b"], act="gelu")
        t_emb = pallas_linear(t_emb, self.p["t2_w"], self.p["t2_b"])

        x = conv2d(x, self.p["stem_w"], self.p["stem_b"], k=7, pad=3)
        down_acts = []
        for scale, (blk, ds) in enumerate(zip(self.down_blocks, self.down_samples)):
            if scale < self.self_attn_scales:
                x = film_convnext_block(blk, x, t_emb, self.n_heads)
            else:
                x = film_convnext_block(blk, x, t_emb, self.n_heads, cond, attention_bias)
            down_acts.append(x)
            x = conv2d_stride(x, ds["w"], ds["b"], k=2)

        x = film_convnext_block(self.mid_block, x, t_emb, self.n_heads, cond, attention_bias)

        for i, (blk, us, uc, act) in enumerate(
                zip(self.up_blocks, self.up_samples, self.up_combines, down_acts[::-1])):
            x = conv_transpose2(x, us["w"], us["b"])
            x = conv2d(jnp.concatenate([x, act], axis=-1), uc["w"], uc["b"], k=5, pad=2)
            if self.n_scales - i - 2 < self.self_attn_scales:
                x = film_convnext_block(blk, x, t_emb, self.n_heads)
            else:
                x = film_convnext_block(blk, x, t_emb, self.n_heads, cond, attention_bias)

        return pallas_linear(x, self.p["head_w"], self.p["head_b"])   # 1x1 head conv


# ----------------------------------------------------------------------------
# External-module stubs (frozen text/image encoders, DDPM scheduler)
# ----------------------------------------------------------------------------
class TextEncoderStub:
    # TODO(synk): the real text_encoder is an external frozen transformer;
    # modeled here as deterministic embedding + Pallas linear projection.
    class Config:
        def __init__(self, hidden_size):
            self.hidden_size = hidden_size

    class Output:
        def __init__(self, last_hidden_state):
            self.last_hidden_state = last_hidden_state

    def __init__(self, pi, vocab_size, hidden_size):
        self.config = self.Config(hidden_size)
        self.embed = pi.normal((vocab_size, hidden_size), std=0.1)
        self.w = pi.normal((hidden_size, hidden_size))
        self.b = pi.zeros((hidden_size,))

    def __call__(self, input_ids, attention_mask):
        emb = jnp.take(self.embed, input_ids, axis=0)        # (B, L, H)
        h = pallas_linear(emb, self.w, self.b, act="gelu")
        return self.Output(h)


class GaussianSample:
    def __init__(self, mean, logvar, key):
        self.mean, self.logvar, self.key = mean, logvar, key

    def sample(self):
        eps = jax.random.normal(self.key, self.mean.shape, jnp.float32)
        return self.mean + jnp.exp(0.5 * self.logvar) * eps


class ImageEncoderStub:
    # TODO(synk): the real image_encoder (VAE) is external; modeled as a single
    # strided patch conv producing mean/logvar of the latent.
    def __init__(self, pi, in_ch, latent_ch, patch=4):
        self.patch = patch
        self.latent_ch = latent_ch
        self.w = pi.normal((patch * patch * in_ch, 2 * latent_ch))
        self.b = pi.zeros((2 * latent_ch,))

    def __call__(self, image_nhwc, key):
        h = conv2d_stride(image_nhwc, self.w, self.b, k=self.patch)
        return GaussianSample(h[..., :self.latent_ch], h[..., self.latent_ch:], key)


class DDPMSchedulerStub:
    class Config:
        def __init__(self, num_train_timesteps):
            self.num_train_timesteps = num_train_timesteps

    def __init__(self, num_train_timesteps=1000):
        self.config = self.Config(num_train_timesteps)
        betas = jnp.linspace(1e-4, 0.02, num_train_timesteps, dtype=jnp.float32)
        self.alphas_cumprod = jnp.cumprod(1.0 - betas)

    def add_noise(self, z, noise, t):
        acp = self.alphas_cumprod[t]
        s1 = jnp.sqrt(acp)[:, None, None, None]
        s2 = jnp.sqrt(1.0 - acp)[:, None, None, None]
        return s1 * z + s2 * noise


# ----------------------------------------------------------------------------
# DiffusionModel
# ----------------------------------------------------------------------------
class DiffusionModelPallas:
    def __init__(self, text_encoder, scheduler, in_channels, d_init, d_t, n_heads,
                 image_encoder=None, n_scales=5, n_cross_attn_scales=3,
                 latent_scale=1.0, pi=None):
        self.latent_scale = latent_scale
        self.scheduler = scheduler
        self.T = scheduler.config.num_train_timesteps
        self.image_encoder = image_encoder
        self.text_encoder = text_encoder
        self.unet = ConditionalFiLMUNetJAX(
            pi, in_channels, d_init, d_t, text_encoder.config.hidden_size,
            n_heads, n_scales, n_cross_attn_scales)

    def encode_cond(self, input_ids, attention_mask):
        cond = self.text_encoder(input_ids, attention_mask).last_hidden_state
        bias = jnp.where(attention_mask.astype(bool), 0.0, -jnp.inf).astype(jnp.float32)
        return cond, bias

    def pred_noise(self, x, t, cond, attention_bias=None):
        return self.unet(x, t, cond, attention_bias)

    def forward(self, image_nchw, input_ids, attention_mask, rng):
        B = image_nchw.shape[0]
        image = jnp.transpose(image_nchw, (0, 2, 3, 1))       # NCHW -> NHWC
        cond, attn_bias = self.encode_cond(input_ids, attention_mask)
        k_enc, k_t, k_noise = jax.random.split(rng, 3)
        z = self.image_encoder(image, k_enc).sample() * self.latent_scale
        t = jax.random.randint(k_t, (B,), 0, self.T)
        noise = jax.random.normal(k_noise, z.shape, jnp.float32)
        noisy_z = self.scheduler.add_noise(z, noise, t)
        pred = self.pred_noise(noisy_z, t, cond, attn_bias)
        return pallas_mse(pred, noise)


# ----------------------------------------------------------------------------
if __name__ == "__main__":
    pi = ParamInit(seed=0)

    in_channels, d_init, d_t, n_heads = 4, 8, 16, 2
    d_cond, vocab = 32, 100
    n_scales, n_cross_attn_scales = 2, 1          # small instance: 16x16 latent -> 8x8 mid

    text_encoder = TextEncoderStub(pi, vocab, d_cond)
    image_encoder = ImageEncoderStub(pi, in_ch=3, latent_ch=in_channels, patch=4)
    scheduler = DDPMSchedulerStub(1000)

    model = DiffusionModelPallas(
        text_encoder, scheduler, in_channels, d_init, d_t, n_heads,
        image_encoder=image_encoder, n_scales=n_scales,
        n_cross_attn_scales=n_cross_attn_scales, latent_scale=1.0, pi=pi)

    key = jax.random.PRNGKey(0)
    k_img, k_ids, k_run = jax.random.split(key, 3)
    B, L = 2, 8
    image = jax.random.normal(k_img, (B, 3, 64, 64), jnp.float32)     # NCHW like PyTorch
    input_ids = jax.random.randint(k_ids, (B, L), 0, vocab)
    attention_mask = jnp.array([[1, 1, 1, 1, 1, 0, 0, 0],
                                [1, 1, 1, 1, 1, 1, 1, 1]], dtype=jnp.int32)

    loss = model.forward(image, input_ids, attention_mask, k_run)
    jax.block_until_ready(loss)
    assert bool(jnp.isfinite(loss))
    print("KERNEL_OK")
</pallas_src>

<mosaic_0001>
module attributes {stable_mosaic.version = 11 : i64} {
  func.func @_matmul_kernel(%arg0: i32, %arg1: i32, %arg2: i32, %arg3: memref<16x128xbf16, #tpu.memory_space<vmem>>, %arg4: memref<128x128xbf16, #tpu.memory_space<vmem>>, %arg5: memref<1x128xf32, #tpu.memory_space<vmem>>, %arg6: memref<16x128xf32, #tpu.memory_space<vmem>>, %arg7: memref<16x128xf32, #tpu.memory_space<vmem>>) attributes {dimension_semantics = [#tpu.dimension_semantics<parallel>, #tpu.dimension_semantics<parallel>, #tpu.dimension_semantics<arbitrary>], iteration_bounds = array<i64: 1, 1, 1>, scalar_prefetch = 0 : i64, scratch_operands = 1 : i64, tpu.core_type = #tpu.core_type<tc>, window_params = [{transform_indices = @transform_0, window_bounds = array<i64: 16, 128>}, {transform_indices = @transform_1, window_bounds = array<i64: 128, 128>}, {transform_indices = @transform_2, window_bounds = array<i64: 1, 128>}, {transform_indices = @transform_3, window_bounds = array<i64: 16, 128>}]} {
    %c0_i32 = arith.constant 0 : i32
    %0 = arith.cmpi eq, %arg2, %c0_i32 : i32
    %1 = arith.extui %0 : i1 to i32
    %c0_i32_0 = arith.constant 0 : i32
    %2 = arith.cmpi ne, %1, %c0_i32_0 : i32
    scf.if %2 {
      %cst_10 = arith.constant 0.000000e+00 : f32
      %12 = vector.broadcast %cst_10 : f32 to vector<16x128xf32>
      %c0_11 = arith.constant 0 : index
      %c0_12 = arith.constant 0 : index
      %13 = vector.load %arg7[%c0_11, %c0_12] : memref<16x128xf32, #tpu.memory_space<vmem>>, vector<16x128xf32>
      tpu.vector_store %arg7[%c0_11, %c0_12], %12 {strides = array<i32>} : memref<16x128xf32, #tpu.memory_space<vmem>>, vector<16x128xf32>,
    } else {
    }
    %c0 = arith.constant 0 : index
    %c0_1 = arith.constant 0 : index
    %3 = vector.load %arg7[%c0, %c0_1] : memref<16x128xf32, #tpu.memory_space<vmem>>, vector<16x128xf32>
    %c0_2 = arith.constant 0 : index
    %c0_3 = arith.constant 0 : index
    %4 = vector.load %arg3[%c0_2, %c0_3] : memref<16x128xbf16, #tpu.memory_space<vmem>>, vector<16x128xbf16>
    %c0_4 = arith.constant 0 : index
    %c0_5 = arith.constant 0 : index
    %5 = vector.load %arg4[%c0_4, %c0_5] : memref<128x128xbf16, #tpu.memory_space<vmem>>, vector<128x128xbf16>
    %cst = arith.constant dense<0.000000e+00> : vector<16x128xf32>
    %6 = tpu.matmul %4, %5, %cst {dimension_numbers = #tpu.dot_dimension_numbers<[1], [0], [0], [1], [0, 0, 1, 1], [], []>} : vector<16x128xbf16>, vector<128x128xbf16>, vector<16x128xf32> -> vector<16x128xf32>
    %7 = arith.addf %3, %6 : vector<16x128xf32>
    %c0_6 = arith.constant 0 : index
    %c0_7 = arith.constant 0 : index
    %8 = vector.load %arg7[%c0_6, %c0_7] : memref<16x128xf32, #tpu.memory_space<vmem>>, vector<16x128xf32>
    tpu.vector_store %arg7[%c0_6, %c0_7], %7 {strides = array<i32>} : memref<16x128xf32, #tpu.memory_space<vmem>>, vector<16x128xf32>,
    %c0_i32_8 = arith.constant 0 : i32
    %9 = arith.cmpi eq, %arg2, %c0_i32_8 : i32
    %10 = arith.extui %9 : i1 to i32
    %c0_i32_9 = arith.constant 0 : i32
    %11 = arith.cmpi ne, %10, %c0_i32_9 : i32
    scf.if %11 {
      %c0_10 = arith.constant 0 : index
      %c0_11 = arith.constant 0 : index
      %12 = vector.load %arg7[%c0_10, %c0_11] : memref<16x128xf32, #tpu.memory_space<vmem>>, vector<16x128xf32>
      %c0_12 = arith.constant 0 : index
      %c0_13 = arith.constant 0 : index
      %13 = vector.load %arg5[%c0_12, %c0_13] : memref<1x128xf32, #tpu.memory_space<vmem>>, vector<1x128xf32>
      %14 = vector.broadcast %13 : vector<1x128xf32> to vector<16x128xf32>
      %15 = arith.addf %12, %14 : vector<16x128xf32>
      %16 = arith.mulf %15, %15 : vector<16x128xf32>
      %17 = arith.mulf %15, %16 : vector<16x128xf32>
      %cst_14 = arith.constant 4.471500e-02 : f32
      %18 = vector.broadcast %cst_14 : f32 to vector<16x128xf32>
      %19 = arith.mulf %18, %17 : vector<16x128xf32>
      %20 = arith.addf %15, %19 : vector<16x128xf32>
      %cst_15 = arith.constant 0.797884583 : f32
      %21 = vector.broadcast %cst_15 : f32 to vector<16x128xf32>
      %22 = arith.mulf %21, %20 : vector<16x128xf32>
      %23 = math.tanh %22 : vector<16x128xf32>
      %cst_16 = arith.constant 1.000000e+00 : f32
      %24 = vector.broadcast %cst_16 : f32 to vector<16x128xf32>
      %25 = arith.addf %24, %23 : vector<16x128xf32>
      %cst_17 = arith.constant 5.000000e-01 : f32
      %26 = vector.broadcast %cst_17 : f32 to vector<16x128xf32>
      %27 = arith.mulf %26, %25 : vector<16x128xf32>
      %28 = arith.mulf %15, %27 : vector<16x128xf32>
      %c0_18 = arith.constant 0 : index
      %c0_19 = arith.constant 0 : index
      %29 = vector.load %arg6[%c0_18, %c0_19] : memref<16x128xf32, #tpu.memory_space<vmem>>, vector<16x128xf32>
      tpu.vector_store %arg6[%c0_18, %c0_19], %28 {strides = array<i32>} : memref<16x128xf32, #tpu.memory_space<vmem>>, vector<16x128xf32>,
    } else {
    }
    return
  }
  func.func @transform_0(%arg0: i32, %arg1: i32, %arg2: i32) -> (i32, i32) {
    %c0_i32 = arith.constant 0 : i32
    return %arg0, %arg2 : i32, i32
  }
  func.func @transform_1(%arg0: i32, %arg1: i32, %arg2: i32) -> (i32, i32) {
    %c0_i32 = arith.constant 0 : i32
    return %arg2, %arg1 : i32, i32
  }
  func.func @transform_2(%arg0: i32, %arg1: i32, %arg2: i32) -> (i32, i32) {
    %c0_i32 = arith.constant 0 : i32
    %c0_i32_0 = arith.constant 0 : i32
    return %c0_i32, %arg1 : i32, i32
  }
  func.func @transform_3(%arg0: i32, %arg1: i32, %arg2: i32) -> (i32, i32) {
    %c0_i32 = arith.constant 0 : i32
    return %arg0, %arg1 : i32, i32
  }
}

</mosaic_0001>

<llo_original>
// kernel: tpu_custom_call.1
$region0: #{tpu_custom_call.1}
  #allocation0 [shape = 'u32[]', space=smem, size = 0x4, offset = 0x4, fixed_abs, tag = 'smem constant byte address 0x4 - core index']
  #allocation1 [shape = 'u32[144,128]{1,0:T(1,128)}', space=vmem, size = 0x12000, scoped, tag = 'internal scratch']
  #allocation2 [shape = 'f32[16,128]{1,0:T(8,128)}', space=vmem, size = 0x2000, scoped, tag = 'scratch operand']
  %s0 = inlined_call_operand.hbm [shape: bf16[16,128], index: 0, kind: input, shape index: {}]
  %s1 = inlined_call_operand.hbm [shape: bf16[128,128], index: 1, kind: input, shape index: {}]
  %s2 = inlined_call_operand.hbm [shape: f32[1,128], index: 2, kind: input, shape index: {}]
  %s3 = inlined_call_operand.hbm [shape: f32[16,128], index: 3, kind: output, shape index: {}]
  %s4 = sld [smem:[#allocation0]]
  $region42: #{tpu_custom_call.1} parent=0
    _
  %s6 = ssub.s32 1, %s4
  %s7 = scalar_select 0, %s6, %s4
  $region1: #{tpu_custom_call.1} parent=0
    #allocation3 [shape = 'u8[4096]{0}', space=vmem, size = 0x1000, scoped, tag = 'input window, operand 0, single buffered']
    #allocation4 [shape = 's32[1]{0}', space=sflag, size = 0x4, scoped, tag = 'scoped memory for tpu_custom_call.1']
    #allocation5 [shape = 's32[1]{0}', space=sflag, size = 0x4, scoped, tag = 'scoped memory for tpu_custom_call.1']
    #allocation6 [shape = 'u8[32768]{0}', space=vmem, size = 0x8000, scoped, tag = 'input window, operand 1, single buffered']
    #allocation7 [shape = 's32[1]{0}', space=sflag, size = 0x4, scoped, tag = 'scoped memory for tpu_custom_call.1']
    #allocation8 [shape = 'u8[512]{0}', space=vmem, size = 0x400, scoped, tag = 'input window, operand 2, single buffered']
    #allocation9 [shape = 'u8[8192]{0}', space=vmem, size = 0x2000, scoped, tag = 'output window, operand 0, single buffered']
    %8 = vsyncpa [#allocation4], 0
    %9 = vsyncpa [#allocation7], 0
    %10 = vsyncpa [#allocation5], 0
    // Predicated region
    $region2: #{tpu_custom_call.1} parent=1 // pred_check
      _
    $region3: #{tpu_custom_call.1} parent=1 // pred_check_branch
      %12 = sbr.rel (0) target = $region5
    $region4: #{tpu_custom_call.1} parent=1 // pred_region
      %s14 = ssub.s32 128, 128
      %15 = vsyncadd [#allocation4], %s14
      %s16 = sshll.u32 [#allocation3], 4
      %s17 = int_to_ptr.vmem [resolvable:$true] %s16
      %22 = dma.hbm_to_vmem [thread:$0]  %s0, 128, %s17, [#allocation4], 64, 64, 4
    $region5: #{tpu_custom_call.1} parent=1 // pred_fallthru
      _
    // Predicated region
    $region6: #{tpu_custom_call.1} parent=1 // pred_check
      _
    $region7: #{tpu_custom_call.1} parent=1 // pred_check_branch
      %24 = sbr.rel (0) target = $region9
    $region8: #{tpu_custom_call.1} parent=1 // pred_region
      %s26 = ssub.s32 1024, 1024
      %27 = vsyncadd [#allocation7], %s26
      %s28 = sshll.u32 [#allocation6], 4
      %s29 = int_to_ptr.vmem [resolvable:$true] %s28
      %34 = dma.hbm_to_vmem [thread:$0]  %s1, 1024, %s29, [#allocation7], 64, 64, 4
    $region9: #{tpu_custom_call.1} parent=1 // pred_fallthru
      _
    // Predicated region
    $region10: #{tpu_custom_call.1} parent=1 // pred_check
      _
    $region11: #{tpu_custom_call.1} parent=1 // pred_check_branch
      %36 = sbr.rel (0) target = $region13
    $region12: #{tpu_custom_call.1} parent=1 // pred_region
      %s38 = ssub.s32 16, 16
      %39 = vsyncadd [#allocation7], %s38
      %s41 = sshll.u32 [#allocation8], 4
      %s42 = int_to_ptr.vmem [resolvable:$true] %s41
      %44 = dma.hbm_to_vmem [thread:$0]  %s2, 16, %s42, [#allocation7]
    $region13: #{tpu_custom_call.1} parent=1 // pred_fallthru
      _
    // Predicated region
    $region14: #{tpu_custom_call.1} parent=1 // pred_check
      _
    $region15: #{tpu_custom_call.1} parent=1 // pred_check_branch
      %46 = sbr.rel (0) target = $region17
    $region16: #{tpu_custom_call.1} parent=1 // pred_region
      %47 = dma.done [#allocation4], 128
    $region17: #{tpu_custom_call.1} parent=1 // pred_fallthru
      _
    // Predicated region
    $region18: #{tpu_custom_call.1} parent=1 // pred_check
      _
    $region19: #{tpu_custom_call.1} parent=1 // pred_check_branch
      %49 = sbr.rel (0) target = $region21
    $region20: #{tpu_custom_call.1} parent=1 // pred_region
      %50 = dma.done [#allocation7], 1024
    $region21: #{tpu_custom_call.1} parent=1 // pred_fallthru
      _
    // Predicated region
    $region22: #{tpu_custom_call.1} parent=1 // pred_check
      _
    $region23: #{tpu_custom_call.1} parent=1 // pred_check_branch
      %52 = sbr.rel (0) target = $region25
    $region24: #{tpu_custom_call.1} parent=1 // pred_region
      %53 = dma.done [#allocation7], 16
    $region25: #{tpu_custom_call.1} parent=1 // pred_fallthru
      _
    %p55 = scmp.eq.s32.totalorder 0, 0
    // Predicated region
    $region26: #{tpu_custom_call.1} parent=1 // pred_check
      %p56 = pneg %p55
    $region27: #{tpu_custom_call.1} parent=1 // pred_check_branch
      %58 = sbr.rel (%p56) target = $region29
    $region28: #{tpu_custom_call.1} parent=1 // pred_region
      %59 = vst [vmem:[#allocation2] sm:$0xff] 0.0
      %60 = vst [vmem:[#allocation2 + $0x8] sm:$0xff] 0.0
    $region29: #{tpu_custom_call.1} parent=1 // pred_fallthru
      _
    %v61 = vld [vmem:[#allocation2] sm:$0xff]
    %v62 = vld [vmem:[#allocation2 + $0x8] sm:$0xff]
    %v63 = vld [vmem:[#allocation3] sm:$0xf]
    %v64 = vld [vmem:[#allocation3 + $0x4] sm:$0xf]
    %v65 = vld [vmem:[#allocation6] sm:$0xf]
    %v66 = vld [vmem:[#allocation6 + $0x4] sm:$0xf]
    %v67 = vld [vmem:[#allocation6 + $0x8] sm:$0xf]
    %v68 = vld [vmem:[#allocation6 + $0xc] sm:$0xf]
    %v69 = vld [vmem:[#allocation6 + $0x10] sm:$0xf]
    %v70 = vld [vmem:[#allocation6 + $0x14] sm:$0xf]
    %v71 = vld [vmem:[#allocation6 + $0x18] sm:$0xf]
    %v72 = vld [vmem:[#allocation6 + $0x1c] sm:$0xf]
    %v73 = vld [vmem:[#allocation6 + $0x20] sm:$0xf]
    %v74 = vld [vmem:[#allocation6 + $0x24] sm:$0xf]
    %v75 = vld [vmem:[#allocation6 + $0x28] sm:$0xf]
    %v76 = vld [vmem:[#allocation6 + $0x2c] sm:$0xf]
    %v77 = vld [vmem:[#allocation6 + $0x30] sm:$0xf]
    %v78 = vld [vmem:[#allocation6 + $0x34] sm:$0xf]
    %v79 = vld [vmem:[#allocation6 + $0x38] sm:$0xf]
    %v80 = vld [vmem:[#allocation6 + $0x3c] sm:$0xf]
    %v83 = vunpack.c.l.b16 %v63
    %v84 = vunpack.c.l.b16 %v64
    %v85 = vpack.c.b16 %v84, %v83
    %v103 = vunpack.c.l.b16 %v65
    %v104 = vunpack.c.l.b16 %v66
    %v105 = vunpack.c.l.b16 %v67
    %v106 = vunpack.c.l.b16 %v68
    %v107 = vunpack.c.l.b16 %v69
    %v108 = vunpack.c.l.b16 %v70
    %v109 = vunpack.c.l.b16 %v71
    %v110 = vunpack.c.l.b16 %v72
    %v111 = vunpack.c.l.b16 %v73
    %v112 = vunpack.c.l.b16 %v74
    %v113 = vunpack.c.l.b16 %v75
    %v114 = vunpack.c.l.b16 %v76
    %v115 = vunpack.c.l.b16 %v77
    %v116 = vunpack.c.l.b16 %v78
    %v117 = vunpack.c.l.b16 %v79
    %v118 = vunpack.c.l.b16 %v80
    %v119 = vpack.c.b16 %v104, %v103
    %v120 = vpack.c.b16 %v106, %v105
    %v121 = vpack.c.b16 %v108, %v107
    %v122 = vpack.c.b16 %v110, %v109
    %v123 = vpack.c.b16 %v112, %v111
    %v124 = vpack.c.b16 %v114, %v113
    %v125 = vpack.c.b16 %v116, %v115
    %v126 = vpack.c.b16 %v118, %v117
    %135 = vmatprep.subr.bf16.mxu0 0
    %136 = vmatpush1.bf16.msra.mxu0 %v119
    %137 = vmatprep.subr.bf16.mxu0 0
    %138 = vmatpush1.bf16.msra.mxu0 %v120
    %139 = vmatprep.subr.bf16.mxu0 0
    %140 = vmatpush1.bf16.msra.mxu0 %v121
    %141 = vmatprep.subr.bf16.mxu0 0
    %142 = vmatpush1.bf16.msra.mxu0 %v122
    %143 = vmatprep.subr.bf16.mxu0 0
    %144 = vmatpush1.bf16.msra.mxu0 %v123
    %145 = vmatprep.subr.bf16.mxu0 0
    %146 = vmatpush1.bf16.msra.mxu0 %v124
    %147 = vmatprep.subr.bf16.mxu0 0
    %148 = vmatpush1.bf16.msra.mxu0 %v125
    %149 = vmatprep.subr.bf16.mxu0 0
    %150 = vmatpush1.bf16.msra.mxu0 %v126
    %151 = vmatprep.subr.bf16.mxu0 0
    %152 = vmatpush1.bf16.msra.mxu0 0
    %153 = vmatprep.subr.bf16.mxu0 0
    %154 = vmatpush1.bf16.msra.mxu0 0
    %155 = vmatprep.subr.bf16.mxu0 0
    %156 = vmatpush1.bf16.msra.mxu0 0
    %157 = vmatprep.subr.bf16.mxu0 0
    %158 = vmatpush1.bf16.msra.mxu0 0
    %159 = vmatprep.subr.bf16.mxu0 0
    %160 = vmatpush1.bf16.msra.mxu0 0
    %161 = vmatprep.subr.bf16.mxu0 0
    %162 = vmatpush1.bf16.msra.mxu0 0
    %163 = vmatprep.subr.bf16.mxu0 0
    %164 = vmatpush1.bf16.msra.mxu0 0
    %165 = vmatprep.subr.bf16.mxu0 0
    %166 = vmatpush1.bf16.msra.mxu0 0
    %167 = vmatprep.mubr.bf16.mxu0 0
    %168 = vmatmul.mubr.bf16.gmra.mrb[0].mxu0 %v85
    %v169 = vpop.f32.mrb[0].mxu0
    %v170 = vadd.f32 0.0, %v169
    %v171 = vpop.f32.mrb[0].mxu0
    %v172 = vpop.f32.mrb[0].mxu0
    %v173 = vadd.f32 0.0, %v172
    %v174 = vpop.f32.mrb[0].mxu0
    %175 = vdwg.mxu0
    %v176 = vadd.f32 %v61, %v170
    %v177 = vadd.f32 %v62, %v173
    %178 = vst [vmem:[#allocation2] sm:$0xff] %v176
    %179 = vst [vmem:[#allocation2 + $0x8] sm:$0xff] %v177
    // Predicated region
    $region30: #{tpu_custom_call.1} parent=1 // pred_check
      %p180 = pneg %p55
    $region31: #{tpu_custom_call.1} parent=1 // pred_check_branch
      %182 = sbr.rel (%p180) target = $region33
    $region32: #{tpu_custom_call.1} parent=1 // pred_region
      %v183 = vld [vmem:[#allocation2] sm:$0xff]
      %v184 = vld [vmem:[#allocation2 + $0x8] sm:$0xff]
      %v185 = vld [vmem:[#allocation8] sm:$0x1]
      %v187 = vlaneseq
      %v188 = vshrl.u32 %v187, 7
      %v189 = vsub.s32 0, %v188
      %v190 = vrot.slane %v185, %v189
      %v192 = vadd.f32 %v183, %v190
      %v193 = vadd.f32 %v184, %v190
      %v194 = vmul.f32 %v192, %v192
      %v195 = vmul.f32 %v193, %v193
      %v196 = vmul.f32 %v192, %v194
      %v197 = vmul.f32 %v193, %v195
      %v198 = vmul.f32 %v196, 0.044715
      %v199 = vmul.f32 %v197, 0.044715
      %v200 = vadd.f32 %v192, %v198
      %v201 = vadd.f32 %v193, %v199
      %v202 = vmul.f32 %v200, 0.7978846
      %v203 = vmul.f32 %v201, 0.7978846
      %v204 = vtanh.pop %v202
      %v205 = vtanh.pop %v203
      %v206 = vadd.f32 %v204, 1.0
      %v207 = vadd.f32 %v205, 1.0
      %v208 = vmul.f32 %v206, 0.5
      %v209 = vmul.f32 %v207, 0.5
      %v210 = vmul.f32 %v192, %v208
      %v211 = vmul.f32 %v193, %v209
      %212 = vst [vmem:[#allocation9] sm:$0xff] %v210
      %213 = vst [vmem:[#allocation9 + $0x8] sm:$0xff] %v211
    $region33: #{tpu_custom_call.1} parent=1 // pred_fallthru
      _
    // Predicated region
    $region34: #{tpu_custom_call.1} parent=1 // pred_check
      _
    $region35: #{tpu_custom_call.1} parent=1 // pred_check_branch
      %215 = sbr.rel (0) target = $region37
    $region36: #{tpu_custom_call.1} parent=1 // pred_region
      %s217 = ssub.s32 256, 256
      %218 = vsyncadd [#allocation5], %s217
      %s219 = sshll.u32 [#allocation9], 4
      %s220 = int_to_ptr.vmem [resolvable:$true] %s219
      %225 = dma.vmem_to_hbm [thread:$0]  %s220, 256, %s3, [#allocation5], 128, 128, 8
    $region37: #{tpu_custom_call.1} parent=1 // pred_fallthru
      _
    // Predicated region
    $region38: #{tpu_custom_call.1} parent=1 // pred_check
      _
    $region39: #{tpu_custom_call.1} parent=1 // pred_check_branch
      %227 = sbr.rel (0) target = $region41
    $region40: #{tpu_custom_call.1} parent=1 // pred_region
      %228 = dma.done [#allocation5], 256
    $region41: #{tpu_custom_call.1} parent=1 // pred_fallthru
      _
    %229 = vsyncpa [#allocation4], 1
    %230 = vsyncpa [#allocation7], 1
    %231 = vsyncpa [#allocation5], 1

</llo_original>
